<compile_context>
chip_gen: v6e
topology: v6e:2x2x1
jax: 0.10.0
libtpu: 0.0.40
codegen_flags: <defaults>
</compile_context>

<pallas_src>
import math
from functools import partial

import jax
import jax.numpy as jnp
from jax.experimental import pallas as pl
from jax.experimental.pallas import tpu as pltpu


def _round_up(n, m):
    return ((n + m - 1) // m) * m


# --------------------------------------------------------------------------- #
# Kernel
# --------------------------------------------------------------------------- #
def _policy_mlp_kernel(num_hidden, *refs):
    """refs = (x_ref, w1, b1, ..., wH, bH, wmu, bmu, mu_out_ref).

    Weights are pre-transposed to (in, out); biases are (1, out) rows.
    The batch dimension is tiled by the grid; weights are VMEM-resident.
    """
    x_ref = refs[0]
    param_refs = refs[1:-1]
    mu_out_ref = refs[-1]

    h = x_ref[...].astype(jnp.float32)

    # Hidden layers: linear + relu (MXU + VPU).
    for i in range(num_hidden):
        w = param_refs[2 * i][...]                      # (in, out)
        b = param_refs[2 * i + 1][...]                  # (1, out)
        h = jnp.dot(h, w, preferred_element_type=jnp.float32) + b
        h = jnp.maximum(h, 0.0)

    # Output head (output dim zero-padded to a multiple of 128 -> dense vst).
    wmu = param_refs[2 * num_hidden][...]               # (in, out_pad)
    bmu = param_refs[2 * num_hidden + 1][...]           # (1, out_pad)
    mu = jnp.dot(h, wmu, preferred_element_type=jnp.float32) + bmu
    mu_out_ref[...] = mu.astype(mu_out_ref.dtype)


# --------------------------------------------------------------------------- #
# One-time parameter preparation (hoisted out of the per-call hot path)
# --------------------------------------------------------------------------- #
def prepare_policy_params(params, min_std=1e-6, out_pad_to=128):
    """Convert PyTorch-layout params into kernel-ready, padded, pre-transposed
    arrays and pre-compute the x-independent `scale`."""
    min_log_std = math.log(min_std)

    num_hidden = 0
    while f"layer{num_hidden + 1}.weight" in params:
        num_hidden += 1

    weights, biases = [], []
    for i in range(1, num_hidden + 1):
        w = jnp.asarray(params[f"layer{i}.weight"], jnp.float32).T      # (in, out)
        b = jnp.asarray(params[f"layer{i}.bias"], jnp.float32).reshape(1, -1)
        weights.append(w)
        biases.append(b)

    wmu = jnp.asarray(params["mu.weight"], jnp.float32).T               # (in, out)
    bmu = jnp.asarray(params["mu.bias"], jnp.float32).reshape(1, -1)
    out_size = wmu.shape[1]
    out_padded = _round_up(out_size, out_pad_to)
    if out_padded != out_size:
        wmu = jnp.pad(wmu, ((0, 0), (0, out_padded - out_size)))
        bmu = jnp.pad(bmu, ((0, 0), (0, out_padded - out_size)))
    weights.append(wmu)
    biases.append(bmu)

    # scale = exp(clamp(sigma, min=log(min_std)))  -- independent of x, computed once.
    sigma = jnp.asarray(params["sigma"], jnp.float32)
    scale = jnp.exp(jnp.maximum(sigma, min_log_std))

    return {
        "weights": tuple(weights),
        "biases": tuple(biases),
        "scale": scale,
        "out_size": out_size,
        "in_size": weights[0].shape[0],
    }


# --------------------------------------------------------------------------- #
# Jitted forward
# --------------------------------------------------------------------------- #
@partial(jax.jit, static_argnames=("out_size", "block_b"))
def _policy_forward_impl(x, weights, biases, *, out_size, block_b):
    num_hidden = len(weights) - 1
    B, in_size = x.shape
    out_padded = weights[-1].shape[1]

    # Pad batch to a multiple of the batch tile.
    b_padded = _round_up(max(B, 1), block_b)
    if b_padded != B:
        x = jnp.pad(x, ((0, b_padded - B), (0, 0)))

    grid = (b_padded // block_b,)

    in_specs = [pl.BlockSpec((block_b, in_size), lambda i: (i, 0))]
    param_args = []
    for w, b in zip(weights, biases):
        # Weights / biases: full-array blocks, same block every grid step
        # (VMEM-resident accumulator-style residency).
        in_specs.append(pl.BlockSpec(w.shape, lambda i: (0, 0)))
        in_specs.append(pl.BlockSpec(b.shape, lambda i: (0, 0)))
        param_args.append(w)
        param_args.append(b)

    mu_pad = pl.pallas_call(
        partial(_policy_mlp_kernel, num_hidden),
        grid=grid,
        in_specs=in_specs,
        out_specs=pl.BlockSpec((block_b, out_padded), lambda i: (i, 0)),
        out_shape=jax.ShapeDtypeStruct((b_padded, out_padded), jnp.float32),
        compiler_params=pltpu.CompilerParams(
            dimension_semantics=("parallel",),
        ),
    )(x, *param_args)

    return mu_pad[:B, :out_size]


def policy_forward(x, prepped, block_b=None):
    """Policy forward: returns (mu, scale) of the Normal distribution.

    x:       (B, input_size) float32
    prepped: output of prepare_policy_params(params)
    """
    B = x.shape[0]
    if block_b is None:
        # Batch tile: sublane-aligned, capped so x/mu tiles double-buffer nicely.
        block_b = min(256, _round_up(max(B, 1), 8))
    mu = _policy_forward_impl(
        x, prepped["weights"], prepped["biases"],
        out_size=prepped["out_size"], block_b=block_b,
    )
    return mu, prepped["scale"]


# --------------------------------------------------------------------------- #
# Parameter init (matches the PyTorch module) and pure-JAX reference
# --------------------------------------------------------------------------- #
def _xavier_uniform(key, out_features, in_features):
    # Matches torch.nn.init.xavier_uniform_ (gain=1).
    a = math.sqrt(6.0 / (in_features + out_features))
    return jax.random.uniform(
        key, (out_features, in_features), jnp.float32, minval=-a, maxval=a
    )


def init_policy_params(key, input_size, output_size, hidden_sizes, init_std=0.1):
    params = {}
    layer_sizes = (input_size,) + tuple(hidden_sizes)
    keys = jax.random.split(key, len(hidden_sizes) + 1)
    for i in range(1, len(hidden_sizes) + 1):
        params[f"layer{i}.weight"] = _xavier_uniform(
            keys[i - 1], layer_sizes[i], layer_sizes[i - 1]
        )
        params[f"layer{i}.bias"] = jnp.zeros((layer_sizes[i],), jnp.float32)
    params["mu.weight"] = _xavier_uniform(keys[-1], output_size, layer_sizes[-1])
    params["mu.bias"] = jnp.zeros((output_size,), jnp.float32)
    params["sigma"] = jnp.full((output_size,), math.log(init_std), jnp.float32)
    return params


def _reference_forward(x, params, min_std=1e-6):
    # Pure-JAX reference matching the PyTorch semantics.
    num_hidden = 0
    while f"layer{num_hidden + 1}.weight" in params:
        num_hidden += 1
    h = x
    for i in range(1, num_hidden + 1):
        h = h @ params[f"layer{i}.weight"].T + params[f"layer{i}.bias"]
        h = jnp.maximum(h, 0.0)
    mu = h @ params["mu.weight"].T + params["mu.bias"]
    scale = jnp.exp(jnp.maximum(params["sigma"], math.log(min_std)))
    return mu, scale


# --------------------------------------------------------------------------- #
# Smoke test
# --------------------------------------------------------------------------- #
if __name__ == "__main__":
    key = jax.random.PRNGKey(0)
    k_params, k_x = jax.random.split(key)

    input_size, output_size = 16, 8
    hidden_sizes = (32, 32)
    batch = 8

    params = init_policy_params(k_params, input_size, output_size, hidden_sizes)
    x = jax.random.normal(k_x, (batch, input_size), jnp.float32)

    # One-time param prep (transpose / reshape / pad / scale) outside the hot path.
    prepped = prepare_policy_params(params)

    mu, scale = policy_forward(x, prepped)
    jax.block_until_ready((mu, scale))

    mu_ref, scale_ref = _reference_forward(x, params)
    assert mu.shape == (batch, output_size)
    assert scale.shape == (output_size,)
    assert jnp.allclose(mu, mu_ref, atol=1e-5, rtol=1e-5)
    assert jnp.allclose(scale, scale_ref, atol=1e-6, rtol=1e-6)

    # Exercise the multi-tile (grid > 1, padded batch) path too.
    x_big = jax.random.normal(k_x, (300, input_size), jnp.float32)
    mu_big, _ = policy_forward(x_big, prepped)
    jax.block_until_ready(mu_big)
    mu_big_ref, _ = _reference_forward(x_big, params)
    assert mu_big.shape == (300, output_size)
    assert jnp.allclose(mu_big, mu_big_ref, atol=1e-4, rtol=1e-4)

    # Normal(loc=mu, scale=scale) is fully determined by (mu, scale); sampling /
    # log_prob are trivial elementwise ops on these outputs in plain JAX.
    print("KERNEL_OK")
</pallas_src>

<mosaic_0001>
module attributes {stable_mosaic.version = 11 : i64} {
  func.func @_policy_mlp_kernel(%arg0: i32, %arg1: memref<8x16xf32, #tpu.memory_space<vmem>>, %arg2: memref<16x32xf32, #tpu.memory_space<vmem>>, %arg3: memref<1x32xf32, #tpu.memory_space<vmem>>, %arg4: memref<32x32xf32, #tpu.memory_space<vmem>>, %arg5: memref<1x32xf32, #tpu.memory_space<vmem>>, %arg6: memref<32x128xf32, #tpu.memory_space<vmem>>, %arg7: memref<1x128xf32, #tpu.memory_space<vmem>>, %arg8: memref<8x128xf32, #tpu.memory_space<vmem>>) attributes {dimension_semantics = [#tpu.dimension_semantics<parallel>], iteration_bounds = array<i64: 1>, scalar_prefetch = 0 : i64, scratch_operands = 0 : i64, tpu.core_type = #tpu.core_type<tc>, window_params = [{transform_indices = @transform_0, window_bounds = array<i64: 8, 16>}, {pipeline_mode = #tpu.pipeline_mode<synchronous>, transform_indices = @transform_1, window_bounds = array<i64: 16, 32>}, {pipeline_mode = #tpu.pipeline_mode<synchronous>, transform_indices = @transform_2, window_bounds = array<i64: 1, 32>}, {pipeline_mode = #tpu.pipeline_mode<synchronous>, transform_indices = @transform_3, window_bounds = array<i64: 32, 32>}, {pipeline_mode = #tpu.pipeline_mode<synchronous>, transform_indices = @transform_4, window_bounds = array<i64: 1, 32>}, {pipeline_mode = #tpu.pipeline_mode<synchronous>, transform_indices = @transform_5, window_bounds = array<i64: 32, 128>}, {pipeline_mode = #tpu.pipeline_mode<synchronous>, transform_indices = @transform_6, window_bounds = array<i64: 1, 128>}, {transform_indices = @transform_7, window_bounds = array<i64: 8, 128>}]} {
    %c0 = arith.constant 0 : index
    %c0_0 = arith.constant 0 : index
    %0 = vector.load %arg1[%c0, %c0_0] : memref<8x16xf32, #tpu.memory_space<vmem>>, vector<8x16xf32>
    %c0_1 = arith.constant 0 : index
    %c0_2 = arith.constant 0 : index
    %1 = vector.load %arg2[%c0_1, %c0_2] : memref<16x32xf32, #tpu.memory_space<vmem>>, vector<16x32xf32>
    %c0_3 = arith.constant 0 : index
    %c0_4 = arith.constant 0 : index
    %2 = vector.load %arg3[%c0_3, %c0_4] : memref<1x32xf32, #tpu.memory_space<vmem>>, vector<1x32xf32>
    %cst = arith.constant dense<0.000000e+00> : vector<8x32xf32>
    %3 = tpu.matmul %0, %1, %cst {dimension_numbers = #tpu.dot_dimension_numbers<[1], [0], [0], [1], [0, 0, 1, 1], [], []>} : vector<8x16xf32>, vector<16x32xf32>, vector<8x32xf32> -> vector<8x32xf32>
    %4 = vector.broadcast %2 : vector<1x32xf32> to vector<8x32xf32>
    %5 = arith.addf %3, %4 : vector<8x32xf32>
    %cst_5 = arith.constant 0.000000e+00 : f32
    %6 = vector.broadcast %cst_5 : f32 to vector<8x32xf32>
    %7 = arith.maximumf %5, %6 : vector<8x32xf32>
    %c0_6 = arith.constant 0 : index
    %c0_7 = arith.constant 0 : index
    %8 = vector.load %arg4[%c0_6, %c0_7] : memref<32x32xf32, #tpu.memory_space<vmem>>, vector<32x32xf32>
    %c0_8 = arith.constant 0 : index
    %c0_9 = arith.constant 0 : index
    %9 = vector.load %arg5[%c0_8, %c0_9] : memref<1x32xf32, #tpu.memory_space<vmem>>, vector<1x32xf32>
    %cst_10 = arith.constant dense<0.000000e+00> : vector<8x32xf32>
    %10 = tpu.matmul %7, %8, %cst_10 {dimension_numbers = #tpu.dot_dimension_numbers<[1], [0], [0], [1], [0, 0, 1, 1], [], []>} : vector<8x32xf32>, vector<32x32xf32>, vector<8x32xf32> -> vector<8x32xf32>
    %11 = vector.broadcast %9 : vector<1x32xf32> to vector<8x32xf32>
    %12 = arith.addf %10, %11 : vector<8x32xf32>
    %cst_11 = arith.constant 0.000000e+00 : f32
    %13 = vector.broadcast %cst_11 : f32 to vector<8x32xf32>
    %14 = arith.maximumf %12, %13 : vector<8x32xf32>
    %c0_12 = arith.constant 0 : index
    %c0_13 = arith.constant 0 : index
    %15 = vector.load %arg6[%c0_12, %c0_13] : memref<32x128xf32, #tpu.memory_space<vmem>>, vector<32x128xf32>
    %c0_14 = arith.constant 0 : index
    %c0_15 = arith.constant 0 : index
    %16 = vector.load %arg7[%c0_14, %c0_15] : memref<1x128xf32, #tpu.memory_space<vmem>>, vector<1x128xf32>
    %cst_16 = arith.constant dense<0.000000e+00> : vector<8x128xf32>
    %17 = tpu.matmul %14, %15, %cst_16 {dimension_numbers = #tpu.dot_dimension_numbers<[1], [0], [0], [1], [0, 0, 1, 1], [], []>} : vector<8x32xf32>, vector<32x128xf32>, vector<8x128xf32> -> vector<8x128xf32>
    %18 = vector.broadcast %16 : vector<1x128xf32> to vector<8x128xf32>
    %19 = arith.addf %17, %18 : vector<8x128xf32>
    %c0_17 = arith.constant 0 : index
    %c0_18 = arith.constant 0 : index
    %20 = vector.load %arg8[%c0_17, %c0_18] : memref<8x128xf32, #tpu.memory_space<vmem>>, vector<8x128xf32>
    tpu.vector_store %arg8[%c0_17, %c0_18], %19 {strides = array<i32>} : memref<8x128xf32, #tpu.memory_space<vmem>>, vector<8x128xf32>,
    return
  }
  func.func @transform_0(%arg0: i32) -> (i32, i32) {
    %c0_i32 = arith.constant 0 : i32
    %c0_i32_0 = arith.constant 0 : i32
    return %arg0, %c0_i32 : i32, i32
  }
  func.func @transform_1(%arg0: i32) -> (i32, i32) {
    %c0_i32 = arith.constant 0 : i32
    %c0_i32_0 = arith.constant 0 : i32
    %c0_i32_1 = arith.constant 0 : i32
    return %c0_i32, %c0_i32_0 : i32, i32
  }
  func.func @transform_2(%arg0: i32) -> (i32, i32) {
    %c0_i32 = arith.constant 0 : i32
    %c0_i32_0 = arith.constant 0 : i32
    %c0_i32_1 = arith.constant 0 : i32
    return %c0_i32, %c0_i32_0 : i32, i32
  }
  func.func @transform_3(%arg0: i32) -> (i32, i32) {
    %c0_i32 = arith.constant 0 : i32
    %c0_i32_0 = arith.constant 0 : i32
    %c0_i32_1 = arith.constant 0 : i32
    return %c0_i32, %c0_i32_0 : i32, i32
  }
  func.func @transform_4(%arg0: i32) -> (i32, i32) {
    %c0_i32 = arith.constant 0 : i32
    %c0_i32_0 = arith.constant 0 : i32
    %c0_i32_1 = arith.constant 0 : i32
    return %c0_i32, %c0_i32_0 : i32, i32
  }
  func.func @transform_5(%arg0: i32) -> (i32, i32) {
    %c0_i32 = arith.constant 0 : i32
    %c0_i32_0 = arith.constant 0 : i32
    %c0_i32_1 = arith.constant 0 : i32
    return %c0_i32, %c0_i32_0 : i32, i32
  }
  func.func @transform_6(%arg0: i32) -> (i32, i32) {
    %c0_i32 = arith.constant 0 : i32
    %c0_i32_0 = arith.constant 0 : i32
    %c0_i32_1 = arith.constant 0 : i32
    return %c0_i32, %c0_i32_0 : i32, i32
  }
  func.func @transform_7(%arg0: i32) -> (i32, i32) {
    %c0_i32 = arith.constant 0 : i32
    %c0_i32_0 = arith.constant 0 : i32
    return %arg0, %c0_i32 : i32, i32
  }
}

</mosaic_0001>

<llo_original>
// kernel: _policy_forward_impl.1
$region0: #{_policy_forward_impl.1}
  #allocation0 [shape = 'u32[]', space=smem, size = 0x4, offset = 0x4, fixed_abs, tag = 'smem constant byte address 0x4 - core index']
  #allocation1 [shape = 'u32[144,128]{1,0:T(1,128)}', space=vmem, size = 0x12000, scoped, tag = 'internal scratch']
  %s0 = inlined_call_operand.hbm [shape: f32[8,16], index: 0, kind: input, shape index: {}]
  %s1 = inlined_call_operand.hbm [shape: f32[16,32], index: 1, kind: input, shape index: {}]
  %s2 = inlined_call_operand.vmem [shape: f32[1,32], index: 2, kind: input, shape index: {}]
  %s3 = inlined_call_operand.hbm [shape: f32[32,32], index: 3, kind: input, shape index: {}]
  %s4 = inlined_call_operand.vmem [shape: f32[1,32], index: 4, kind: input, shape index: {}]
  %s5 = inlined_call_operand.hbm [shape: f32[32,128], index: 5, kind: input, shape index: {}]
  %s6 = inlined_call_operand.vmem [shape: f32[1,128], index: 6, kind: input, shape index: {}]
  %s7 = inlined_call_operand.hbm [shape: f32[8,128], index: 7, kind: output, shape index: {}]
  %s8 = sld [smem:[#allocation0]]
  $region54: #{_policy_forward_impl.1} parent=0
    _
  %s10 = ssub.s32 1, %s8
  %s11 = scalar_select 0, %s10, %s8
  $region1: #{_policy_forward_impl.1} parent=0
    #allocation2 [shape = 'u8[4096]{0}', space=vmem, size = 0x1000, scoped, tag = 'input window, operand 0, single buffered']
    #allocation3 [shape = 's32[1]{0}', space=sflag, size = 0x4, scoped, tag = 'scoped memory for _policy_forward_impl.1']
    #allocation4 [shape = 's32[1]{0}', space=sflag, size = 0x4, scoped, tag = 'scoped memory for _policy_forward_impl.1']
    #allocation5 [shape = 'u8[8192]{0}', space=vmem, size = 0x2000, scoped, tag = 'input window, operand 1, single buffered']
    #allocation6 [shape = 's32[1]{0}', space=sflag, size = 0x4, scoped, tag = 'scoped memory for _policy_forward_impl.1']
    #allocation7 [shape = 'u8[16384]{0}', space=vmem, size = 0x4000, scoped, tag = 'input window, operand 3, single buffered']
    #allocation8 [shape = 'u8[16384]{0}', space=vmem, size = 0x4000, scoped, tag = 'input window, operand 5, single buffered']
    #allocation9 [shape = 's32[1]{0}', space=sflag, size = 0x4, scoped, tag = 'scoped memory for _policy_forward_impl.1']
    #allocation10 [shape = 'u8[4096]{0}', space=vmem, size = 0x1000, scoped, tag = 'output window, operand 0, single buffered']
    %12 = vsyncpa [#allocation3], 0
    %13 = vsyncpa [#allocation6], 0
    %14 = vsyncpa [#allocation9], 0
    %15 = vsyncpa [#allocation4], 0
    // Predicated region
    $region2: #{_policy_forward_impl.1} parent=1 // pred_check
      _
    $region3: #{_policy_forward_impl.1} parent=1 // pred_check_branch
      %17 = sbr.rel (0) target = $region5
    $region4: #{_policy_forward_impl.1} parent=1 // pred_region
      %s19 = ssub.s32 128, 128
      %20 = vsyncadd [#allocation3], %s19
      %s22 = sshll.u32 [#allocation2], 4
      %s23 = int_to_ptr.vmem [resolvable:$true] %s22
      %25 = dma.hbm_to_vmem [thread:$0]  %s0, 128, %s23, [#allocation3]
    $region5: #{_policy_forward_impl.1} parent=1 // pred_fallthru
      _
    // Predicated region
    $region6: #{_policy_forward_impl.1} parent=1 // pred_check
      _
    $region7: #{_policy_forward_impl.1} parent=1 // pred_check_branch
      %27 = sbr.rel (0) target = $region9
    $region8: #{_policy_forward_impl.1} parent=1 // pred_region
      %s29 = ssub.s32 256, 256
      %30 = vsyncadd [#allocation6], %s29
      %s31 = sshll.u32 [#allocation5], 4
      %s32 = int_to_ptr.vmem [resolvable:$true] %s31
      %37 = dma.hbm_to_vmem [thread:$0]  %s1, 256, %s32, [#allocation6], 128, 128, 8
    $region9: #{_policy_forward_impl.1} parent=1 // pred_fallthru
      _
    // Predicated region
    $region10: #{_policy_forward_impl.1} parent=1 // pred_check
      _
    $region11: #{_policy_forward_impl.1} parent=1 // pred_check_branch
      %39 = sbr.rel (0) target = $region13
    $region12: #{_policy_forward_impl.1} parent=1 // pred_region
      _
    $region13: #{_policy_forward_impl.1} parent=1 // pred_fallthru
      _
    // Predicated region
    $region14: #{_policy_forward_impl.1} parent=1 // pred_check
      _
    $region15: #{_policy_forward_impl.1} parent=1 // pred_check_branch
      %41 = sbr.rel (0) target = $region17
    $region16: #{_policy_forward_impl.1} parent=1 // pred_region
      %s43 = ssub.s32 512, 512
      %44 = vsyncadd [#allocation6], %s43
      %s45 = sshll.u32 [#allocation7], 4
      %s46 = int_to_ptr.vmem [resolvable:$true] %s45
      %51 = dma.hbm_to_vmem [thread:$0]  %s3, 512, %s46, [#allocation6], 128, 128, 8
    $region17: #{_policy_forward_impl.1} parent=1 // pred_fallthru
      _
    // Predicated region
    $region18: #{_policy_forward_impl.1} parent=1 // pred_check
      _
    $region19: #{_policy_forward_impl.1} parent=1 // pred_check_branch
      %53 = sbr.rel (0) target = $region21
    $region20: #{_policy_forward_impl.1} parent=1 // pred_region
      _
    $region21: #{_policy_forward_impl.1} parent=1 // pred_fallthru
      _
    // Predicated region
    $region22: #{_policy_forward_impl.1} parent=1 // pred_check
      _
    $region23: #{_policy_forward_impl.1} parent=1 // pred_check_branch
      %55 = sbr.rel (0) target = $region25
    $region24: #{_policy_forward_impl.1} parent=1 // pred_region
      %s57 = ssub.s32 512, 512
      %58 = vsyncadd [#allocation9], %s57
      %s59 = sshll.u32 [#allocation8], 4
      %s60 = int_to_ptr.vmem [resolvable:$true] %s59
      %65 = dma.hbm_to_vmem [thread:$0]  %s5, 512, %s60, [#allocation9], 128, 128, 8
    $region25: #{_policy_forward_impl.1} parent=1 // pred_fallthru
      _
    // Predicated region
    $region26: #{_policy_forward_impl.1} parent=1 // pred_check
      _
    $region27: #{_policy_forward_impl.1} parent=1 // pred_check_branch
      %67 = sbr.rel (0) target = $region29
    $region28: #{_policy_forward_impl.1} parent=1 // pred_region
      _
    $region29: #{_policy_forward_impl.1} parent=1 // pred_fallthru
      _
    // Predicated region
    $region30: #{_policy_forward_impl.1} parent=1 // pred_check
      _
    $region31: #{_policy_forward_impl.1} parent=1 // pred_check_branch
      %69 = sbr.rel (0) target = $region33
    $region32: #{_policy_forward_impl.1} parent=1 // pred_region
      %70 = dma.done [#allocation3], 128
    $region33: #{_policy_forward_impl.1} parent=1 // pred_fallthru
      _
    // Predicated region
    $region34: #{_policy_forward_impl.1} parent=1 // pred_check
      _
    $region35: #{_policy_forward_impl.1} parent=1 // pred_check_branch
      %72 = sbr.rel (0) target = $region37
    $region36: #{_policy_forward_impl.1} parent=1 // pred_region
      %73 = dma.done [#allocation6], 256
    $region37: #{_policy_forward_impl.1} parent=1 // pred_fallthru
      _
    // Predicated region
    $region38: #{_policy_forward_impl.1} parent=1 // pred_check
      _
    $region39: #{_policy_forward_impl.1} parent=1 // pred_check_branch
      %75 = sbr.rel (0) target = $region41
    $region40: #{_policy_forward_impl.1} parent=1 // pred_region
      %76 = dma.done [#allocation6], 512
    $region41: #{_policy_forward_impl.1} parent=1 // pred_fallthru
      _
    // Predicated region
    $region42: #{_policy_forward_impl.1} parent=1 // pred_check
      _
    $region43: #{_policy_forward_impl.1} parent=1 // pred_check_branch
      %78 = sbr.rel (0) target = $region45
    $region44: #{_policy_forward_impl.1} parent=1 // pred_region
      %79 = dma.done [#allocation9], 512
    $region45: #{_policy_forward_impl.1} parent=1 // pred_fallthru
      _
    %v80 = vld [vmem:[#allocation2] sm:$0xff]
    %v81 = vld [vmem:[#allocation5] sm:$0xff]
    %v82 = vld [vmem:[#allocation5 + $0x8] sm:$0xff]
    %v83 = vld [vmem:[%s2] sm:$0x1]
    %v85 = vlaneseq
    %v86 = vshrl.u32 %v85, 7
    %v87 = vsub.s32 0, %v86
    %v88 = vrot.slane %v83, %v87
    %vm90 = vcmask 130048
    %v92 = vsel %vm90, %v80, 0
    %94 = vmatprep.subr.mxu0 0.0
    %95 = vmatpush1.msra.mxu0 0.0
    %96 = vmatprep.subr.mxu0 0.0
    %97 = vmatpush1.msra.mxu0 0.0
    %98 = vmatprep.subr.mxu0 0.0
    %99 = vmatpush1.msra.mxu0 0.0
    %100 = vmatprep.subr.mxu0 0.0
    %101 = vmatpush1.msra.mxu0 0.0
    %102 = vmatprep.subr.mxu0 0.0
    %103 = vmatpush1.msra.mxu0 0.0
    %104 = vmatprep.subr.mxu0 0.0
    %105 = vmatpush1.msra.mxu0 0.0
    %106 = vmatprep.subr.mxu0 0.0
    %107 = vmatpush1.msra.mxu0 0.0
    %108 = vmatprep.subr.mxu0 0.0
    %109 = vmatpush1.msra.mxu0 0.0
    %110 = vmatprep.subr.mxu0 0.0
    %111 = vmatpush1.msra.mxu0 0.0
    %112 = vmatprep.subr.mxu0 0.0
    %113 = vmatpush1.msra.mxu0 0.0
    %114 = vmatprep.subr.mxu0 0.0
    %115 = vmatpush1.msra.mxu0 0.0
    %116 = vmatprep.subr.mxu0 0.0
    %117 = vmatpush1.msra.mxu0 0.0
    %118 = vmatprep.subr.mxu0 0.0
    %119 = vmatpush1.msra.mxu0 0.0
    %120 = vmatprep.subr.mxu0 0.0
    %121 = vmatpush1.msra.mxu0 0.0
    %122 = vmatprep.subr.mxu0 0.0
    %123 = vmatpush1.msra.mxu0 %v82
    %124 = vmatprep.subr.mxu0 0.0
    %125 = vmatpush1.msra.mxu0 %v81
    %126 = vmatprep.subr.mxu0 0.0
    %127 = vmatpush2.msra.mxu0 0.0
    %128 = vmatprep.subr.mxu0 0.0
    %129 = vmatpush2.msra.mxu0 0.0
    %130 = vmatprep.subr.mxu0 0.0
    %131 = vmatpush2.msra.mxu0 0.0
    %132 = vmatprep.subr.mxu0 0.0
    %133 = vmatpush2.msra.mxu0 0.0
    %134 = vmatprep.subr.mxu0 0.0
    %135 = vmatpush2.msra.mxu0 0.0
    %136 = vmatprep.subr.mxu0 0.0
    %137 = vmatpush2.msra.mxu0 0.0
    %138 = vmatprep.subr.mxu0 0.0
    %139 = vmatpush2.msra.mxu0 0.0
    %140 = vmatprep.subr.mxu0 0.0
    %141 = vmatpush2.msra.mxu0 0.0
    %142 = vmatprep.subr.mxu0 0.0
    %143 = vmatpush2.msra.mxu0 0.0
    %144 = vmatprep.subr.mxu0 0.0
    %145 = vmatpush2.msra.mxu0 0.0
    %146 = vmatprep.subr.mxu0 0.0
    %147 = vmatpush2.msra.mxu0 0.0
    %148 = vmatprep.subr.mxu0 0.0
    %149 = vmatpush2.msra.mxu0 0.0
    %150 = vmatprep.subr.mxu0 0.0
    %151 = vmatpush2.msra.mxu0 0.0
    %152 = vmatprep.subr.mxu0 0.0
    %153 = vmatpush2.msra.mxu0 0.0
    %154 = vmatprep.subr.mxu0 0.0
    %155 = vmatpush2.msra.mxu0 0.0
    %156 = vmatprep.subr.mxu0 0.0
    %157 = vmatpush2.msra.mxu0 0.0
    %158 = vmatprep.mubr.f32.mxu0 0.0
    %159 = vmatmul.mubr.f32.gmra.mxu0 %v92
    %v160 = vpop.f32.mrf.mxu0
    %v161 = vadd.f32 %v88, %v160
    %v162 = vpop.f32.mrf.mxu0
    %163 = vdwg.mxu0
    %v164 = vmax.f32 %v161, 0.0
    %v165 = vld [vmem:[#allocation7] sm:$0xff]
    %v166 = vld [vmem:[#allocation7 + $0x8] sm:$0xff]
    %v167 = vld [vmem:[#allocation7 + $0x10] sm:$0xff]
    %v168 = vld [vmem:[#allocation7 + $0x18] sm:$0xff]
    %v169 = vld [vmem:[%s4] sm:$0x1]
    %v171 = vlaneseq
    %v172 = vshrl.u32 %v171, 7
    %v173 = vsub.s32 0, %v172
    %v174 = vrot.slane %v169, %v173
    %vm176 = vcmask 261120
    %v178 = vsel %vm176, %v164, 0
    %180 = vmatprep.subr.mxu0 0.0
    %181 = vmatpush1.msra.mxu0 0.0
    %182 = vmatprep.subr.mxu0 0.0
    %183 = vmatpush1.msra.mxu0 0.0
    %184 = vmatprep.subr.mxu0 0.0
    %185 = vmatpush1.msra.mxu0 0.0
    %186 = vmatprep.subr.mxu0 0.0
    %187 = vmatpush1.msra.mxu0 0.0
    %188 = vmatprep.subr.mxu0 0.0
    %189 = vmatpush1.msra.mxu0 0.0
    %190 = vmatprep.subr.mxu0 0.0
    %191 = vmatpush1.msra.mxu0 0.0
    %192 = vmatprep.subr.mxu0 0.0
    %193 = vmatpush1.msra.mxu0 0.0
    %194 = vmatprep.subr.mxu0 0.0
    %195 = vmatpush1.msra.mxu0 0.0
    %196 = vmatprep.subr.mxu0 0.0
    %197 = vmatpush1.msra.mxu0 0.0
    %198 = vmatprep.subr.mxu0 0.0
    %199 = vmatpush1.msra.mxu0 0.0
    %200 = vmatprep.subr.mxu0 0.0
    %201 = vmatpush1.msra.mxu0 0.0
    %202 = vmatprep.subr.mxu0 0.0
    %203 = vmatpush1.msra.mxu0 0.0
    %204 = vmatprep.subr.mxu0 0.0
    %205 = vmatpush1.msra.mxu0 %v168
    %206 = vmatprep.subr.mxu0 0.0
    %207 = vmatpush1.msra.mxu0 %v167
    %208 = vmatprep.subr.mxu0 0.0
    %209 = vmatpush1.msra.mxu0 %v166
    %210 = vmatprep.subr.mxu0 0.0
    %211 = vmatpush1.msra.mxu0 %v165
    %212 = vmatprep.subr.mxu0 0.0
    %213 = vmatpush2.msra.mxu0 0.0
    %214 = vmatprep.subr.mxu0 0.0
    %215 = vmatpush2.msra.mxu0 0.0
    %216 = vmatprep.subr.mxu0 0.0
    %217 = vmatpush2.msra.mxu0 0.0
    %218 = vmatprep.subr.mxu0 0.0
    %219 = vmatpush2.msra.mxu0 0.0
    %220 = vmatprep.subr.mxu0 0.0
    %221 = vmatpush2.msra.mxu0 0.0
    %222 = vmatprep.subr.mxu0 0.0
    %223 = vmatpush2.msra.mxu0 0.0
    %224 = vmatprep.subr.mxu0 0.0
    %225 = vmatpush2.msra.mxu0 0.0
    %226 = vmatprep.subr.mxu0 0.0
    %227 = vmatpush2.msra.mxu0 0.0
    %228 = vmatprep.subr.mxu0 0.0
    %229 = vmatpush2.msra.mxu0 0.0
    %230 = vmatprep.subr.mxu0 0.0
    %231 = vmatpush2.msra.mxu0 0.0
    %232 = vmatprep.subr.mxu0 0.0
    %233 = vmatpush2.msra.mxu0 0.0
    %234 = vmatprep.subr.mxu0 0.0
    %235 = vmatpush2.msra.mxu0 0.0
    %236 = vmatprep.subr.mxu0 0.0
    %237 = vmatpush2.msra.mxu0 0.0
    %238 = vmatprep.subr.mxu0 0.0
    %239 = vmatpush2.msra.mxu0 0.0
    %240 = vmatprep.subr.mxu0 0.0
    %241 = vmatpush2.msra.mxu0 0.0
    %242 = vmatprep.subr.mxu0 0.0
    %243 = vmatpush2.msra.mxu0 0.0
    %244 = vmatprep.mubr.f32.mxu0 0.0
    %245 = vmatmul.mubr.f32.gmra.mxu0 %v178
    %v246 = vpop.f32.mrf.mxu0
    %v247 = vadd.f32 %v174, %v246
    %v248 = vpop.f32.mrf.mxu0
    %249 = vdwg.mxu0
    %v250 = vmax.f32 %v247, 0.0
    %v251 = vld [vmem:[#allocation8] sm:$0xff]
    %v252 = vld [vmem:[#allocation8 + $0x8] sm:$0xff]
    %v253 = vld [vmem:[#allocation8 + $0x10] sm:$0xff]
    %v254 = vld [vmem:[#allocation8 + $0x18] sm:$0xff]
    %v255 = vld [vmem:[%s6] sm:$0x1]
    %v257 = vlaneseq
    %v258 = vshrl.u32 %v257, 7
    %v259 = vsub.s32 0, %v258
    %v260 = vrot.slane %v255, %v259
    %v263 = vsel %vm176, %v250, 0
    %265 = vmatprep.subr.mxu0 0.0
    %266 = vmatpush1.msra.mxu0 0.0
    %267 = vmatprep.subr.mxu0 0.0
    %268 = vmatpush1.msra.mxu0 0.0
    %269 = vmatprep.subr.mxu0 0.0
    %270 = vmatpush1.msra.mxu0 0.0
    %271 = vmatprep.subr.mxu0 0.0
    %272 = vmatpush1.msra.mxu0 0.0
    %273 = vmatprep.subr.mxu0 0.0
    %274 = vmatpush1.msra.mxu0 0.0
    %275 = vmatprep.subr.mxu0 0.0
    %276 = vmatpush1.msra.mxu0 0.0
    %277 = vmatprep.subr.mxu0 0.0
    %278 = vmatpush1.msra.mxu0 0.0
    %279 = vmatprep.subr.mxu0 0.0
    %280 = vmatpush1.msra.mxu0 0.0
    %281 = vmatprep.subr.mxu0 0.0
    %282 = vmatpush1.msra.mxu0 0.0
    %283 = vmatprep.subr.mxu0 0.0
    %284 = vmatpush1.msra.mxu0 0.0
    %285 = vmatprep.subr.mxu0 0.0
    %286 = vmatpush1.msra.mxu0 0.0
    %287 = vmatprep.subr.mxu0 0.0
    %288 = vmatpush1.msra.mxu0 0.0
    %289 = vmatprep.subr.mxu0 0.0
    %290 = vmatpush1.msra.mxu0 %v254
    %291 = vmatprep.subr.mxu0 0.0
    %292 = vmatpush1.msra.mxu0 %v253
    %293 = vmatprep.subr.mxu0 0.0
    %294 = vmatpush1.msra.mxu0 %v252
    %295 = vmatprep.subr.mxu0 0.0
    %296 = vmatpush1.msra.mxu0 %v251
    %297 = vmatprep.subr.mxu0 0.0
    %298 = vmatpush2.msra.mxu0 0.0
    %299 = vmatprep.subr.mxu0 0.0
    %300 = vmatpush2.msra.mxu0 0.0
    %301 = vmatprep.subr.mxu0 0.0
    %302 = vmatpush2.msra.mxu0 0.0
    %303 = vmatprep.subr.mxu0 0.0
    %304 = vmatpush2.msra.mxu0 0.0
    %305 = vmatprep.subr.mxu0 0.0
    %306 = vmatpush2.msra.mxu0 0.0
    %307 = vmatprep.subr.mxu0 0.0
    %308 = vmatpush2.msra.mxu0 0.0
    %309 = vmatprep.subr.mxu0 0.0
    %310 = vmatpush2.msra.mxu0 0.0
    %311 = vmatprep.subr.mxu0 0.0
    %312 = vmatpush2.msra.mxu0 0.0
    %313 = vmatprep.subr.mxu0 0.0
    %314 = vmatpush2.msra.mxu0 0.0
    %315 = vmatprep.subr.mxu0 0.0
    %316 = vmatpush2.msra.mxu0 0.0
    %317 = vmatprep.subr.mxu0 0.0
    %318 = vmatpush2.msra.mxu0 0.0
    %319 = vmatprep.subr.mxu0 0.0
    %320 = vmatpush2.msra.mxu0 0.0
    %321 = vmatprep.subr.mxu0 0.0
    %322 = vmatpush2.msra.mxu0 0.0
    %323 = vmatprep.subr.mxu0 0.0
    %324 = vmatpush2.msra.mxu0 0.0
    %325 = vmatprep.subr.mxu0 0.0
    %326 = vmatpush2.msra.mxu0 0.0
    %327 = vmatprep.subr.mxu0 0.0
    %328 = vmatpush2.msra.mxu0 0.0
    %329 = vmatprep.mubr.f32.mxu0 0.0
    %330 = vmatmul.mubr.f32.gmra.mxu0 %v263
    %v331 = vpop.f32.mrf.mxu0
    %v332 = vadd.f32 %v260, %v331
    %v333 = vpop.f32.mrf.mxu0
    %334 = vdwg.mxu0
    %335 = vst [vmem:[#allocation10] sm:$0xff] %v332
    // Predicated region
    $region46: #{_policy_forward_impl.1} parent=1 // pred_check
      _
    $region47: #{_policy_forward_impl.1} parent=1 // pred_check_branch
      %337 = sbr.rel (0) target = $region49
    $region48: #{_policy_forward_impl.1} parent=1 // pred_region
      %s339 = ssub.s32 128, 128
      %340 = vsyncadd [#allocation4], %s339
      %s342 = sshll.u32 [#allocation10], 4
      %s343 = int_to_ptr.vmem [resolvable:$true] %s342
      %345 = dma.vmem_to_hbm [thread:$0]  %s343, 128, %s7, [#allocation4]
    $region49: #{_policy_forward_impl.1} parent=1 // pred_fallthru
      _
    // Predicated region
    $region50: #{_policy_forward_impl.1} parent=1 // pred_check
      _
    $region51: #{_policy_forward_impl.1} parent=1 // pred_check_branch
      %347 = sbr.rel (0) target = $region53
    $region52: #{_policy_forward_impl.1} parent=1 // pred_region
      %348 = dma.done [#allocation4], 128
    $region53: #{_policy_forward_impl.1} parent=1 // pred_fallthru
      _
    %349 = vsyncpa [#allocation3], 1
    %350 = vsyncpa [#allocation6], 1
    %351 = vsyncpa [#allocation9], 1
    %352 = vsyncpa [#allocation4], 1

</llo_original>
